<compile_context>
chip_gen: v7x
topology: tpu7x:2x2x1
jax: 0.10.0
libtpu: 0.0.40
codegen_flags: <defaults>
</compile_context>

<pallas_src>
import functools
import math

import jax
import jax.numpy as jnp
import numpy as np
from jax.experimental import pallas as pl
from jax.experimental.pallas import tpu as pltpu


def _round_up(x: int, m: int) -> int:
    return -(-x // m) * m


def _ntxent_kernel(x0_ref, lab0_ref, x1t_ref, lab1_ref,
                   loss_ref, valid_ref, pos_acc, all_acc, *,
                   inv_t: float, rows_valid: int, all_sum_const: float):
    i = pl.program_id(0)           # row-tile index   ("parallel")
    j = pl.program_id(1)           # column-tile index ("arbitrary", innermost)
    tm = x0_ref.shape[0]
    tn = x1t_ref.shape[1]

    @pl.when(j == 0)
    def _init():
        pos_acc[...] = jnp.zeros_like(pos_acc)
        all_acc[...] = jnp.zeros_like(all_acc)

    # NN matmul of pre-normalized bf16 operands; 1/temperature is already
    # folded into the out0 scale, accumulation in f32 on the MXU.
    logits = jnp.dot(x0_ref[...], x1t_ref[...],
                     preferred_element_type=jnp.float32)      # (tm, tn)

    # exp with the known upper bound 1/temperature subtracted (cosine <= 1),
    # robust to small temperatures; the shift cancels in the final ratio.
    e = jnp.exp(logits - inv_t)

    lab_c = lab0_ref[...]                                     # (tm, 1) int32
    lab_r = lab1_ref[...]                                     # (1, tn) int32
    row_ids = i * tm + jax.lax.broadcasted_iota(jnp.int32, (tm, 1), 0)
    col_ids = j * tn + jax.lax.broadcasted_iota(jnp.int32, (1, tn), 1)

    pos_mask = (lab_c == lab_r) & (lab_c != -1) & (lab_r != -1)
    pos_mask = pos_mask | (row_ids == col_ids)                # forced diagonal

    pos_acc[...] += jnp.sum(jnp.where(pos_mask, e, 0.0), axis=1, keepdims=True)
    all_acc[...] += jnp.sum(e, axis=1, keepdims=True)

    @pl.when(j == pl.num_programs(1) - 1)
    def _finalize():
        # all_sum_const = (1e-8 - num_padded_cols) * exp(-1/T):
        # removes the padded-column contributions and adds the reference's
        # 1e-8 epsilon (both expressed in the shifted exp scale).
        all_tot = all_acc[...] + all_sum_const                # (tm, 1)
        pos = pos_acc[...]
        valid = (pos > 0.0) & (row_ids < rows_valid)
        per_row = jnp.log(all_tot) - jnp.log(jnp.where(valid, pos, 1.0))
        loss_sum = jnp.sum(jnp.where(valid, per_row, 0.0))
        cnt = jnp.sum(valid.astype(jnp.float32))
        # Lane-dense per-row-tile partials.
        loss_ref[...] = jnp.full(loss_ref.shape, loss_sum, jnp.float32)
        valid_ref[...] = jnp.full(valid_ref.shape, cnt, jnp.float32)


def _vmem_bytes_estimate(tm: int, tn: int, d: int) -> int:
    b = 2 * tm * d * 2            # out0 row tiles (bf16, double-buffered)
    b += 2 * d * tn * 2           # out1^T column tiles (bf16, double-buffered)
    b += 2 * tm * 128 * 4         # label column tiles (lane-padded int32)
    b += 2 * 8 * tn * 4           # label row tiles (sublane-padded int32)
    b += 2 * 2 * 8 * 128 * 4      # lane-dense partial outputs
    b += 2 * tm * 128 * 4         # accumulator scratch (lane-padded)
    b += 8 * tm * tn * 4          # in-flight (tm, tn) f32 temporaries
    return b


def supervised_ntxent_loss(out0, out1, labels, temperature: float = 0.5,
                           row_block: int = 256, col_block: int = 1024):
    """out0, out1: (B, D) float; labels: (B,) int (-1 = unlabeled negative)."""
    B, D = out0.shape
    assert row_block % 128 == 0 and col_block % 128 == 0
    inv_t = 1.0 / float(temperature)

    # Clamp tiles to the (128-rounded) batch so tiny batches do not over-pad.
    # On v7x prefer row_block values giving an even number of row tiles so the
    # "parallel" axis balances across both TensorCores.
    tm = min(row_block, _round_up(B, 128))
    tn = min(col_block, _round_up(B, 128))
    n_row_tiles = _round_up(B, tm) // tm
    n_col_tiles = _round_up(B, tn) // tn
    bp_r = n_row_tiles * tm
    bp_c = n_col_tiles * tn
    pad_r = bp_r - B
    pad_c = bp_c - B

    out0 = out0.astype(jnp.float32)
    out1 = out1.astype(jnp.float32)
    labels = labels.astype(jnp.int32)
    if pad_r:
        out0 = jnp.pad(out0, ((0, pad_r), (0, 0)))
    if pad_c:
        out1 = jnp.pad(out1, ((0, pad_c), (0, 0)))

    # Hoisted L2 normalization (once, in f32).  max(norm, eps) keeps padded
    # zero rows exactly zero, which the padded-column scalar correction relies
    # on.  1/temperature is folded into the out0 scale (bf16 relative error is
    # scale-invariant).
    n0 = jnp.sqrt(jnp.sum(out0 * out0, axis=1, keepdims=True))
    x0n = (out0 / jnp.maximum(n0, 1e-12) * inv_t).astype(jnp.bfloat16)
    n1 = jnp.sqrt(jnp.sum(out1 * out1, axis=1, keepdims=True))
    x1n = (out1 / jnp.maximum(n1, 1e-12)).astype(jnp.bfloat16)
    x1nT = x1n.T                                   # (D, bp_c) bf16, NN matmul

    lab_col = jnp.pad(labels, (0, pad_r), constant_values=-1).reshape(bp_r, 1)
    lab_row = jnp.pad(labels, (0, pad_c), constant_values=-1).reshape(1, bp_c)

    all_sum_const = float((1e-8 - pad_c) * math.exp(-inv_t))

    kernel = functools.partial(_ntxent_kernel, inv_t=inv_t, rows_valid=B,
                               all_sum_const=all_sum_const)

    vmem_limit = int(min(56 << 20,
                         max(32 << 20, 2 * _vmem_bytes_estimate(tm, tn, D))))

    loss_parts, valid_parts = pl.pallas_call(
        kernel,
        out_shape=(jax.ShapeDtypeStruct((n_row_tiles, 8, 128), jnp.float32),
                   jax.ShapeDtypeStruct((n_row_tiles, 8, 128), jnp.float32)),
        grid_spec=pltpu.PrefetchScalarGridSpec(
            num_scalar_prefetch=0,
            grid=(n_row_tiles, n_col_tiles),
            in_specs=[
                pl.BlockSpec((tm, D), lambda i, j: (i, 0)),   # out0 row tile (bf16)
                pl.BlockSpec((tm, 1), lambda i, j: (i, 0)),   # labels, column form
                pl.BlockSpec((D, tn), lambda i, j: (0, j)),   # out1^T column tile (bf16)
                pl.BlockSpec((1, tn), lambda i, j: (0, j)),   # labels, row form
            ],
            out_specs=[
                pl.BlockSpec((1, 8, 128), lambda i, j: (i, 0, 0)),
                pl.BlockSpec((1, 8, 128), lambda i, j: (i, 0, 0)),
            ],
            scratch_shapes=[
                pltpu.VMEM((tm, 1), jnp.float32),   # positive_sum accumulator
                pltpu.VMEM((tm, 1), jnp.float32),   # all_sum accumulator
            ],
        ),
        compiler_params=pltpu.CompilerParams(
            dimension_semantics=("parallel", "arbitrary"),
            vmem_limit_bytes=vmem_limit,
        ),
    )(x0n, lab_col, x1nT, lab_row)

    loss_sum = jnp.sum(loss_parts[:, 0, 0])
    valid_sum = jnp.sum(valid_parts[:, 0, 0])
    return loss_sum / valid_sum


def _reference_loss(out0, out1, labels, temperature=0.5):
    # Pure-JAX f32 reference mirroring the PyTorch forward.
    out0 = out0 / jnp.maximum(jnp.linalg.norm(out0, axis=1, keepdims=True), 1e-12)
    out1 = out1 / jnp.maximum(jnp.linalg.norm(out1, axis=1, keepdims=True), 1e-12)
    logits = (out0 @ out1.T) / temperature
    logits_exp = jnp.exp(logits)
    l = labels
    pos = (l[:, None] == l[None, :]) & (l[:, None] != -1) & (l[None, :] != -1)
    pos = pos | jnp.eye(logits.shape[0], dtype=bool)
    positive_sum = jnp.sum(logits_exp * pos, axis=1)
    all_sum = jnp.sum(logits_exp, axis=1) + 1e-8
    valid = positive_sum > 0
    per_row = -jnp.log(jnp.where(valid, positive_sum, 1.0) / all_sum)
    return jnp.sum(jnp.where(valid, per_row, 0.0)) / jnp.sum(valid)


if __name__ == "__main__":
    key = jax.random.PRNGKey(0)
    k0, k1 = jax.random.split(key)
    B, D = 8, 32
    out0 = jax.random.normal(k0, (B, D), dtype=jnp.float32)
    out1 = jax.random.normal(k1, (B, D), dtype=jnp.float32)
    labels = jnp.array([0, 1, 0, 2, -1, 1, 2, -1], dtype=jnp.int32)

    loss = supervised_ntxent_loss(out0, out1, labels, temperature=0.5)
    jax.block_until_ready(loss)

    ref = _reference_loss(out0, out1, labels, temperature=0.5)
    # bf16 MXU operands => loosened (but still tight for this loss scale) tolerance.
    assert np.allclose(np.asarray(loss), np.asarray(ref), rtol=2e-2, atol=2e-2), (
        loss, ref)
    print("KERNEL_OK")
</pallas_src>

<mosaic_0001>
module attributes {stable_mosaic.version = 11 : i64} {
  func.func @_ntxent_kernel(%arg0: i32, %arg1: i32, %arg2: memref<128x32xbf16, #tpu.memory_space<vmem>>, %arg3: memref<128x1xi32, #tpu.memory_space<vmem>>, %arg4: memref<32x128xbf16, #tpu.memory_space<vmem>>, %arg5: memref<1x128xi32, #tpu.memory_space<vmem>>, %arg6: memref<1x8x128xf32, #tpu.memory_space<vmem>>, %arg7: memref<1x8x128xf32, #tpu.memory_space<vmem>>, %arg8: memref<128x1xf32, #tpu.memory_space<vmem>>, %arg9: memref<128x1xf32, #tpu.memory_space<vmem>>) attributes {dimension_semantics = [#tpu.dimension_semantics<parallel>, #tpu.dimension_semantics<arbitrary>], iteration_bounds = array<i64: 1, 1>, scalar_prefetch = 0 : i64, scratch_operands = 2 : i64, tpu.core_type = #tpu.core_type<tc>, window_params = [{transform_indices = @transform_0, window_bounds = array<i64: 128, 32>}, {transform_indices = @transform_1, window_bounds = array<i64: 128, 1>}, {transform_indices = @transform_2, window_bounds = array<i64: 32, 128>}, {transform_indices = @transform_3, window_bounds = array<i64: 1, 128>}, {transform_indices = @transform_4, window_bounds = array<i64: 1, 8, 128>}, {transform_indices = @transform_5, window_bounds = array<i64: 1, 8, 128>}]} {
    %c0_i32 = arith.constant 0 : i32
    %0 = arith.cmpi eq, %arg1, %c0_i32 : i32
    %1 = arith.extui %0 : i1 to i32
    %c0_i32_0 = arith.constant 0 : i32
    %2 = arith.cmpi ne, %1, %c0_i32_0 : i32
    scf.if %2 {
      %cst_24 = arith.constant 0.000000e+00 : f32
      %49 = vector.broadcast %cst_24 : f32 to vector<128x1xf32>
      %c0_25 = arith.constant 0 : index
      %c0_26 = arith.constant 0 : index
      %50 = vector.load %arg8[%c0_25, %c0_26] : memref<128x1xf32, #tpu.memory_space<vmem>>, vector<128x1xf32>
      tpu.vector_store %arg8[%c0_25, %c0_26], %49 {strides = array<i32>} : memref<128x1xf32, #tpu.memory_space<vmem>>, vector<128x1xf32>,
      %cst_27 = arith.constant 0.000000e+00 : f32
      %51 = vector.broadcast %cst_27 : f32 to vector<128x1xf32>
      %c0_28 = arith.constant 0 : index
      %c0_29 = arith.constant 0 : index
      %52 = vector.load %arg9[%c0_28, %c0_29] : memref<128x1xf32, #tpu.memory_space<vmem>>, vector<128x1xf32>
      tpu.vector_store %arg9[%c0_28, %c0_29], %51 {strides = array<i32>} : memref<128x1xf32, #tpu.memory_space<vmem>>, vector<128x1xf32>,
    } else {
    }
    %c0 = arith.constant 0 : index
    %c0_1 = arith.constant 0 : index
    %3 = vector.load %arg2[%c0, %c0_1] : memref<128x32xbf16, #tpu.memory_space<vmem>>, vector<128x32xbf16>
    %c0_2 = arith.constant 0 : index
    %c0_3 = arith.constant 0 : index
    %4 = vector.load %arg4[%c0_2, %c0_3] : memref<32x128xbf16, #tpu.memory_space<vmem>>, vector<32x128xbf16>
    %cst = arith.constant dense<0.000000e+00> : vector<128x128xf32>
    %5 = tpu.matmul %3, %4, %cst {dimension_numbers = #tpu.dot_dimension_numbers<[1], [0], [0], [1], [0, 0, 1, 1], [], []>} : vector<128x32xbf16>, vector<32x128xbf16>, vector<128x128xf32> -> vector<128x128xf32>
    %cst_4 = arith.constant 2.000000e+00 : f32
    %6 = vector.broadcast %cst_4 : f32 to vector<128x128xf32>
    %7 = arith.subf %5, %6 : vector<128x128xf32>
    %8 = math.exp %7 : vector<128x128xf32>
    %c0_5 = arith.constant 0 : index
    %c0_6 = arith.constant 0 : index
    %9 = vector.load %arg3[%c0_5, %c0_6] : memref<128x1xi32, #tpu.memory_space<vmem>>, vector<128x1xi32>
    %c0_7 = arith.constant 0 : index
    %c0_8 = arith.constant 0 : index
    %10 = vector.load %arg5[%c0_7, %c0_8] : memref<1x128xi32, #tpu.memory_space<vmem>>, vector<1x128xi32>
    %c128_i32 = arith.constant 128 : i32
    %11 = arith.muli %arg0, %c128_i32 : i32
    %12 = tpu.iota {dimensions = array<i32: 0>} : vector<128x1xi32>
    %13 = vector.broadcast %11 : i32 to vector<128x1xi32>
    %14 = arith.addi %13, %12 : vector<128x1xi32>
    %c128_i32_9 = arith.constant 128 : i32
    %15 = arith.muli %arg1, %c128_i32_9 : i32
    %16 = tpu.iota {dimensions = array<i32: 1>} : vector<1x128xi32>
    %17 = vector.broadcast %15 : i32 to vector<1x128xi32>
    %18 = arith.addi %17, %16 : vector<1x128xi32>
    %19 = vector.broadcast %9 : vector<128x1xi32> to vector<128x128xi32>
    %20 = vector.broadcast %10 : vector<1x128xi32> to vector<128x128xi32>
    %21 = arith.cmpi eq, %19, %20 : vector<128x128xi32>
    %c-1_i32 = arith.constant -1 : i32
    %22 = vector.broadcast %c-1_i32 : i32 to vector<128x1xi32>
    %23 = arith.cmpi ne, %9, %22 : vector<128x1xi32>
    %24 = vector.broadcast %23 : vector<128x1xi1> to vector<128x128xi1>
    %25 = arith.andi %21, %24 : vector<128x128xi1>
    %c-1_i32_10 = arith.constant -1 : i32
    %26 = vector.broadcast %c-1_i32_10 : i32 to vector<1x128xi32>
    %27 = arith.cmpi ne, %10, %26 : vector<1x128xi32>
    %28 = vector.broadcast %27 : vector<1x128xi1> to vector<128x128xi1>
    %29 = arith.andi %25, %28 : vector<128x128xi1>
    %30 = vector.broadcast %14 : vector<128x1xi32> to vector<128x128xi32>
    %31 = vector.broadcast %18 : vector<1x128xi32> to vector<128x128xi32>
    %32 = arith.cmpi eq, %30, %31 : vector<128x128xi32>
    %33 = arith.ori %29, %32 : vector<128x128xi1>
    %c0_11 = arith.constant 0 : index
    %c0_12 = arith.constant 0 : index
    %34 = vector.load %arg8[%c0_11, %c0_12] : memref<128x1xf32, #tpu.memory_space<vmem>>, vector<128x1xf32>
    %cst_13 = arith.constant 0.000000e+00 : f32
    %35 = vector.broadcast %cst_13 : f32 to vector<128x128xf32>
    %36 = arith.select %33, %8, %35 : vector<128x128xi1>, vector<128x128xf32>
    %cst_14 = arith.constant dense<0.000000e+00> : vector<128xf32>
    %37 = vector.multi_reduction <add>, %36, %cst_14 [1] : vector<128x128xf32> to vector<128xf32>
    %38 = vector.shape_cast %37 : vector<128xf32> to vector<128x1xf32>
    %39 = arith.addf %34, %38 : vector<128x1xf32>
    %c0_15 = arith.constant 0 : index
    %c0_16 = arith.constant 0 : index
    %40 = vector.load %arg8[%c0_15, %c0_16] : memref<128x1xf32, #tpu.memory_space<vmem>>, vector<128x1xf32>
    tpu.vector_store %arg8[%c0_15, %c0_16], %39 {strides = array<i32>} : memref<128x1xf32, #tpu.memory_space<vmem>>, vector<128x1xf32>,
    %c0_17 = arith.constant 0 : index
    %c0_18 = arith.constant 0 : index
    %41 = vector.load %arg9[%c0_17, %c0_18] : memref<128x1xf32, #tpu.memory_space<vmem>>, vector<128x1xf32>
    %cst_19 = arith.constant dense<0.000000e+00> : vector<128xf32>
    %42 = vector.multi_reduction <add>, %8, %cst_19 [1] : vector<128x128xf32> to vector<128xf32>
    %43 = vector.shape_cast %42 : vector<128xf32> to vector<128x1xf32>
    %44 = arith.addf %41, %43 : vector<128x1xf32>
    %c0_20 = arith.constant 0 : index
    %c0_21 = arith.constant 0 : index
    %45 = vector.load %arg9[%c0_20, %c0_21] : memref<128x1xf32, #tpu.memory_space<vmem>>, vector<128x1xf32>
    tpu.vector_store %arg9[%c0_20, %c0_21], %44 {strides = array<i32>} : memref<128x1xf32, #tpu.memory_space<vmem>>, vector<128x1xf32>,
    %c0_i32_22 = arith.constant 0 : i32
    %46 = arith.cmpi eq, %arg1, %c0_i32_22 : i32
    %47 = arith.extui %46 : i1 to i32
    %c0_i32_23 = arith.constant 0 : i32
    %48 = arith.cmpi ne, %47, %c0_i32_23 : i32
    scf.if %48 {
      %c0_24 = arith.constant 0 : index
      %c0_25 = arith.constant 0 : index
      %49 = vector.load %arg9[%c0_24, %c0_25] : memref<128x1xf32, #tpu.memory_space<vmem>>, vector<128x1xf32>
      %cst_26 = arith.constant -16.2402344 : f32
      %50 = vector.broadcast %cst_26 : f32 to vector<128x1xf32>
      %51 = arith.addf %49, %50 : vector<128x1xf32>
      %c0_27 = arith.constant 0 : index
      %c0_28 = arith.constant 0 : index
      %52 = vector.load %arg8[%c0_27, %c0_28] : memref<128x1xf32, #tpu.memory_space<vmem>>, vector<128x1xf32>
      %cst_29 = arith.constant 0.000000e+00 : f32
      %53 = vector.broadcast %cst_29 : f32 to vector<128x1xf32>
      %54 = arith.cmpf ogt, %52, %53 : vector<128x1xf32>
      %c8_i32 = arith.constant 8 : i32
      %55 = vector.broadcast %c8_i32 : i32 to vector<128x1xi32>
      %56 = arith.cmpi slt, %14, %55 : vector<128x1xi32>
      %57 = arith.andi %54, %56 : vector<128x1xi1>
      %58 = math.log %51 : vector<128x1xf32>
      %cst_30 = arith.constant 1.000000e+00 : f32
      %59 = vector.broadcast %cst_30 : f32 to vector<128x1xf32>
      %60 = arith.select %57, %52, %59 : vector<128x1xi1>, vector<128x1xf32>
      %61 = math.log %60 : vector<128x1xf32>
      %62 = arith.subf %58, %61 : vector<128x1xf32>
      %cst_31 = arith.constant 0.000000e+00 : f32
      %63 = vector.broadcast %cst_31 : f32 to vector<128x1xf32>
      %64 = arith.select %57, %62, %63 : vector<128x1xi1>, vector<128x1xf32>
      %65 = vector.shape_cast %64 : vector<128x1xf32> to vector<1x128x1xf32>
      %cst_32 = arith.constant dense<0.000000e+00> : vector<1xf32>
      %66 = vector.multi_reduction <add>, %65, %cst_32 [1, 2] : vector<1x128x1xf32> to vector<1xf32>
      %67 = vector.shape_cast %66 : vector<1xf32> to vector<1x1x1xf32>
      %68 = vector.extract %67[0, 0, 0] : f32 from vector<1x1x1xf32>
      %69 = arith.extui %57 : vector<128x1xi1> to vector<128x1xi32>
      %70 = arith.sitofp %69 : vector<128x1xi32> to vector<128x1xf32>
      %71 = vector.shape_cast %70 : vector<128x1xf32> to vector<1x128x1xf32>
      %cst_33 = arith.constant dense<0.000000e+00> : vector<1xf32>
      %72 = vector.multi_reduction <add>, %71, %cst_33 [1, 2] : vector<1x128x1xf32> to vector<1xf32>
      %73 = vector.shape_cast %72 : vector<1xf32> to vector<1x1x1xf32>
      %74 = vector.extract %73[0, 0, 0] : f32 from vector<1x1x1xf32>
      %75 = vector.broadcast %68 : f32 to vector<1x8x128xf32>
      %c0_34 = arith.constant 0 : index
      %c0_35 = arith.constant 0 : index
      %c0_36 = arith.constant 0 : index
      %76 = vector.load %arg6[%c0_34, %c0_35, %c0_36] : memref<1x8x128xf32, #tpu.memory_space<vmem>>, vector<1x8x128xf32>
      tpu.vector_store %arg6[%c0_34, %c0_35, %c0_36], %75 {strides = array<i32>} : memref<1x8x128xf32, #tpu.memory_space<vmem>>, vector<1x8x128xf32>,
      %77 = vector.broadcast %74 : f32 to vector<1x8x128xf32>
      %c0_37 = arith.constant 0 : index
      %c0_38 = arith.constant 0 : index
      %c0_39 = arith.constant 0 : index
      %78 = vector.load %arg7[%c0_37, %c0_38, %c0_39] : memref<1x8x128xf32, #tpu.memory_space<vmem>>, vector<1x8x128xf32>
      tpu.vector_store %arg7[%c0_37, %c0_38, %c0_39], %77 {strides = array<i32>} : memref<1x8x128xf32, #tpu.memory_space<vmem>>, vector<1x8x128xf32>,
    } else {
    }
    return
  }
  func.func @transform_0(%arg0: i32, %arg1: i32) -> (i32, i32) {
    %c0_i32 = arith.constant 0 : i32
    %c0_i32_0 = arith.constant 0 : i32
    return %arg0, %c0_i32 : i32, i32
  }
  func.func @transform_1(%arg0: i32, %arg1: i32) -> (i32, i32) {
    %c0_i32 = arith.constant 0 : i32
    %c0_i32_0 = arith.constant 0 : i32
    return %arg0, %c0_i32 : i32, i32
  }
  func.func @transform_2(%arg0: i32, %arg1: i32) -> (i32, i32) {
    %c0_i32 = arith.constant 0 : i32
    %c0_i32_0 = arith.constant 0 : i32
    return %c0_i32, %arg1 : i32, i32
  }
  func.func @transform_3(%arg0: i32, %arg1: i32) -> (i32, i32) {
    %c0_i32 = arith.constant 0 : i32
    %c0_i32_0 = arith.constant 0 : i32
    return %c0_i32, %arg1 : i32, i32
  }
  func.func @transform_4(%arg0: i32, %arg1: i32) -> (i32, i32, i32) {
    %c0_i32 = arith.constant 0 : i32
    %c0_i32_0 = arith.constant 0 : i32
    %c0_i32_1 = arith.constant 0 : i32
    return %arg0, %c0_i32, %c0_i32_0 : i32, i32, i32
  }
  func.func @transform_5(%arg0: i32, %arg1: i32) -> (i32, i32, i32) {
    %c0_i32 = arith.constant 0 : i32
    %c0_i32_0 = arith.constant 0 : i32
    %c0_i32_1 = arith.constant 0 : i32
    return %arg0, %c0_i32, %c0_i32_0 : i32, i32, i32
  }
}

</mosaic_0001>

<llo_original>
// kernel: tpu_custom_call.1
$region0: #{tpu_custom_call.1}
  #allocation0 [shape = 'u32[]', space=smem, size = 0x4, offset = 0x4, fixed_abs, tag = 'smem constant byte address 0x4 - core index']
  #allocation1 [shape = 'u32[144,128]{1,0:T(1,128)}', space=vmem, size = 0x12000, scoped, tag = 'internal scratch']
  #allocation2 [shape = 'f32[128,1]{1,0:T(8,128)}', space=vmem, size = 0x10000, scoped, tag = 'scratch operand']
  #allocation3 [shape = 'f32[128,1]{1,0:T(8,128)}', space=vmem, size = 0x10000, scoped, tag = 'scratch operand']
  %s0 = inlined_call_operand.vmem [shape: bf16[128,32], index: 0, kind: input, shape index: {}]
  %s1 = inlined_call_operand.vmem [shape: s32[128,1], index: 1, kind: input, shape index: {}]
  %s2 = inlined_call_operand.vmem [shape: bf16[32,128], index: 2, kind: input, shape index: {}]
  %s3 = inlined_call_operand.vmem [shape: s32[1,128], index: 3, kind: input, shape index: {}]
  %s4 = inlined_call_operand.hbm [shape: f32[1,8,128], index: 4, kind: output, shape index: {0}]
  %s5 = inlined_call_operand.hbm [shape: f32[1,8,128], index: 5, kind: output, shape index: {1}]
  %6 = xla_tuple %s4, %s5
  %s7 = sld [smem:[#allocation0]]
  $region42: #{tpu_custom_call.1} parent=0
    _
  %s9 = ssub.s32 1, %s7
  %s10 = scalar_select 0, %s9, %s7
  $region1: #{tpu_custom_call.1} parent=0
    #allocation4 [shape = 'u8[4096]{0}', space=vmem, size = 0x1000, scoped, tag = 'output window, operand 0, single buffered']
    #allocation5 [shape = 's32[1]{0}', space=sflag, size = 0x4, scoped, tag = 'scoped memory for tpu_custom_call.1']
    #allocation6 [shape = 'u8[4096]{0}', space=vmem, size = 0x1000, scoped, tag = 'output window, operand 1, single buffered']
    #allocation7 [shape = 's32[1]{0}', space=sflag, size = 0x4, scoped, tag = 'scoped memory for tpu_custom_call.1']
    %11 = vsyncpa [#allocation5], 0
    %12 = vsyncpa [#allocation7], 0
    // Predicated region
    $region2: #{tpu_custom_call.1} parent=1 // pred_check
      _
    $region3: #{tpu_custom_call.1} parent=1 // pred_check_branch
      %14 = sbr.rel (0) target = $region5
    $region4: #{tpu_custom_call.1} parent=1 // pred_region
      _
    $region5: #{tpu_custom_call.1} parent=1 // pred_fallthru
      _
    // Predicated region
    $region6: #{tpu_custom_call.1} parent=1 // pred_check
      _
    $region7: #{tpu_custom_call.1} parent=1 // pred_check_branch
      %16 = sbr.rel (0) target = $region9
    $region8: #{tpu_custom_call.1} parent=1 // pred_region
      _
    $region9: #{tpu_custom_call.1} parent=1 // pred_fallthru
      _
    // Predicated region
    $region10: #{tpu_custom_call.1} parent=1 // pred_check
      _
    $region11: #{tpu_custom_call.1} parent=1 // pred_check_branch
      %18 = sbr.rel (0) target = $region13
    $region12: #{tpu_custom_call.1} parent=1 // pred_region
      _
    $region13: #{tpu_custom_call.1} parent=1 // pred_fallthru
      _
    // Predicated region
    $region14: #{tpu_custom_call.1} parent=1 // pred_check
      _
    $region15: #{tpu_custom_call.1} parent=1 // pred_check_branch
      %20 = sbr.rel (0) target = $region17
    $region16: #{tpu_custom_call.1} parent=1 // pred_region
      _
    $region17: #{tpu_custom_call.1} parent=1 // pred_fallthru
      _
    %p22 = scmp.eq.s32.totalorder 0, 0
    // Predicated region
    $region18: #{tpu_custom_call.1} parent=1 // pred_check
      %p23 = pneg %p22
    $region19: #{tpu_custom_call.1} parent=1 // pred_check_branch
      %25 = sbr.rel (%p23) target = $region21
    $region20: #{tpu_custom_call.1} parent=1 // pred_region
      %vm26 = vcmask 7168
      %27 = vst.msk [vmem:[#allocation2] sm:$0xff] %vm26, 0.0
      %28 = vst.msk [vmem:[#allocation2 + $0x8] sm:$0xff] %vm26, 0.0
      %29 = vst.msk [vmem:[#allocation2 + $0x10] sm:$0xff] %vm26, 0.0
      %30 = vst.msk [vmem:[#allocation2 + $0x18] sm:$0xff] %vm26, 0.0
      %31 = vst.msk [vmem:[#allocation2 + $0x20] sm:$0xff] %vm26, 0.0
      %32 = vst.msk [vmem:[#allocation2 + $0x28] sm:$0xff] %vm26, 0.0
      %33 = vst.msk [vmem:[#allocation2 + $0x30] sm:$0xff] %vm26, 0.0
      %34 = vst.msk [vmem:[#allocation2 + $0x38] sm:$0xff] %vm26, 0.0
      %35 = vst.msk [vmem:[#allocation2 + $0x40] sm:$0xff] %vm26, 0.0
      %36 = vst.msk [vmem:[#allocation2 + $0x48] sm:$0xff] %vm26, 0.0
      %37 = vst.msk [vmem:[#allocation2 + $0x50] sm:$0xff] %vm26, 0.0
      %38 = vst.msk [vmem:[#allocation2 + $0x58] sm:$0xff] %vm26, 0.0
      %39 = vst.msk [vmem:[#allocation2 + $0x60] sm:$0xff] %vm26, 0.0
      %40 = vst.msk [vmem:[#allocation2 + $0x68] sm:$0xff] %vm26, 0.0
      %41 = vst.msk [vmem:[#allocation2 + $0x70] sm:$0xff] %vm26, 0.0
      %42 = vst.msk [vmem:[#allocation2 + $0x78] sm:$0xff] %vm26, 0.0
      %43 = vst.msk [vmem:[#allocation3] sm:$0xff] %vm26, 0.0
      %44 = vst.msk [vmem:[#allocation3 + $0x8] sm:$0xff] %vm26, 0.0
      %45 = vst.msk [vmem:[#allocation3 + $0x10] sm:$0xff] %vm26, 0.0
      %46 = vst.msk [vmem:[#allocation3 + $0x18] sm:$0xff] %vm26, 0.0
      %47 = vst.msk [vmem:[#allocation3 + $0x20] sm:$0xff] %vm26, 0.0
      %48 = vst.msk [vmem:[#allocation3 + $0x28] sm:$0xff] %vm26, 0.0
      %49 = vst.msk [vmem:[#allocation3 + $0x30] sm:$0xff] %vm26, 0.0
      %50 = vst.msk [vmem:[#allocation3 + $0x38] sm:$0xff] %vm26, 0.0
      %51 = vst.msk [vmem:[#allocation3 + $0x40] sm:$0xff] %vm26, 0.0
      %52 = vst.msk [vmem:[#allocation3 + $0x48] sm:$0xff] %vm26, 0.0
      %53 = vst.msk [vmem:[#allocation3 + $0x50] sm:$0xff] %vm26, 0.0
      %54 = vst.msk [vmem:[#allocation3 + $0x58] sm:$0xff] %vm26, 0.0
      %55 = vst.msk [vmem:[#allocation3 + $0x60] sm:$0xff] %vm26, 0.0
      %56 = vst.msk [vmem:[#allocation3 + $0x68] sm:$0xff] %vm26, 0.0
      %57 = vst.msk [vmem:[#allocation3 + $0x70] sm:$0xff] %vm26, 0.0
      %58 = vst.msk [vmem:[#allocation3 + $0x78] sm:$0xff] %vm26, 0.0
    $region21: #{tpu_custom_call.1} parent=1 // pred_fallthru
      _
    %v59 = vld [vmem:[%s0] sm:$0xf]
    %v60 = vld [vmem:[%s0 + $0x4] sm:$0xf]
    %v61 = vld [vmem:[%s0 + $0x8] sm:$0xf]
    %v62 = vld [vmem:[%s0 + $0xc] sm:$0xf]
    %v63 = vld [vmem:[%s0 + $0x10] sm:$0xf]
    %v64 = vld [vmem:[%s0 + $0x14] sm:$0xf]
    %v65 = vld [vmem:[%s0 + $0x18] sm:$0xf]
    %v66 = vld [vmem:[%s0 + $0x1c] sm:$0xf]
    %v67 = vld [vmem:[%s0 + $0x20] sm:$0xf]
    %v68 = vld [vmem:[%s0 + $0x24] sm:$0xf]
    %v69 = vld [vmem:[%s0 + $0x28] sm:$0xf]
    %v70 = vld [vmem:[%s0 + $0x2c] sm:$0xf]
    %v71 = vld [vmem:[%s0 + $0x30] sm:$0xf]
    %v72 = vld [vmem:[%s0 + $0x34] sm:$0xf]
    %v73 = vld [vmem:[%s0 + $0x38] sm:$0xf]
    %v74 = vld [vmem:[%s0 + $0x3c] sm:$0xf]
    %v75 = vld [vmem:[%s2] sm:$0xf]
    %v76 = vld [vmem:[%s2 + $0x4] sm:$0xf]
    %v77 = vld [vmem:[%s2 + $0x8] sm:$0xf]
    %v78 = vld [vmem:[%s2 + $0xc] sm:$0xf]
    %v95 = vunpack.c.l.b16 %v59
    %v96 = vunpack.c.l.b16 %v60
    %v97 = vunpack.c.l.b16 %v61
    %v98 = vunpack.c.l.b16 %v62
    %v99 = vunpack.c.l.b16 %v63
    %v100 = vunpack.c.l.b16 %v64
    %v101 = vunpack.c.l.b16 %v65
    %v102 = vunpack.c.l.b16 %v66
    %v103 = vunpack.c.l.b16 %v67
    %v104 = vunpack.c.l.b16 %v68
    %v105 = vunpack.c.l.b16 %v69
    %v106 = vunpack.c.l.b16 %v70
    %v107 = vunpack.c.l.b16 %v71
    %v108 = vunpack.c.l.b16 %v72
    %v109 = vunpack.c.l.b16 %v73
    %v110 = vunpack.c.l.b16 %v74
    %v111 = vpack.c.b16 %v96, %v95
    %v112 = vpack.c.b16 %v98, %v97
    %v113 = vpack.c.b16 %v100, %v99
    %v114 = vpack.c.b16 %v102, %v101
    %v115 = vpack.c.b16 %v104, %v103
    %v116 = vpack.c.b16 %v106, %v105
    %v117 = vpack.c.b16 %v108, %v107
    %v118 = vpack.c.b16 %v110, %v109
    %v123 = vunpack.c.l.b16 %v75
    %v124 = vunpack.c.l.b16 %v76
    %v125 = vunpack.c.l.b16 %v77
    %v126 = vunpack.c.l.b16 %v78
    %v127 = vpack.c.b16 %v124, %v123
    %v128 = vpack.c.b16 %v126, %v125
    %vm131 = vcmask 261120
    %v133 = vsel %vm131, %v111, 0
    %v136 = vsel %vm131, %v112, 0
    %v139 = vsel %vm131, %v113, 0
    %v142 = vsel %vm131, %v114, 0
    %v145 = vsel %vm131, %v115, 0
    %v148 = vsel %vm131, %v116, 0
    %v151 = vsel %vm131, %v117, 0
    %v154 = vsel %vm131, %v118, 0
    %156 = vmatprep.subr.bf16.mxu0 0
    %157 = vmatpush1.bf16.msra.mxu0 %v127
    %158 = vmatprep.subr.bf16.mxu0 0
    %159 = vmatpush1.bf16.msra.mxu0 %v128
    %160 = vmatprep.subr.bf16.mxu0 0
    %161 = vmatpush1.bf16.msra.mxu0 0
    %162 = vmatprep.subr.bf16.mxu0 0
    %163 = vmatpush1.bf16.msra.mxu0 0
    %164 = vmatprep.subr.bf16.mxu0 0
    %165 = vmatpush1.bf16.msra.mxu0 0
    %166 = vmatprep.subr.bf16.mxu0 0
    %167 = vmatpush1.bf16.msra.mxu0 0
    %168 = vmatprep.subr.bf16.mxu0 0
    %169 = vmatpush1.bf16.msra.mxu0 0
    %170 = vmatprep.subr.bf16.mxu0 0
    %171 = vmatpush1.bf16.msra.mxu0 0
    %172 = vmatprep.subr.bf16.mxu0 0
    %173 = vmatpush1.bf16.msra.mxu0 0
    %174 = vmatprep.subr.bf16.mxu0 0
    %175 = vmatpush1.bf16.msra.mxu0 0
    %176 = vmatprep.subr.bf16.mxu0 0
    %177 = vmatpush1.bf16.msra.mxu0 0
    %178 = vmatprep.subr.bf16.mxu0 0
    %179 = vmatpush1.bf16.msra.mxu0 0
    %180 = vmatprep.subr.bf16.mxu0 0
    %181 = vmatpush1.bf16.msra.mxu0 0
    %182 = vmatprep.subr.bf16.mxu0 0
    %183 = vmatpush1.bf16.msra.mxu0 0
    %184 = vmatprep.subr.bf16.mxu0 0
    %185 = vmatpush1.bf16.msra.mxu0 0
    %186 = vmatprep.subr.bf16.mxu0 0
    %187 = vmatpush1.bf16.msra.mxu0 0
    %188 = vmatprep.mubr.bf16.mxu0 0
    %189 = vmatmul.mubr.bf16.gmra.mrb[0].mxu0 %v133
    %v190 = vpop.f32.mrb[0].mxu0
    %v191 = vadd.f32 0.0, %v190
    %v192 = vpop.f32.mrb[0].mxu0
    %v193 = vpop.f32.mrb[0].mxu0
    %v194 = vadd.f32 0.0, %v193
    %v195 = vpop.f32.mrb[0].mxu0
    %196 = vmatprep.mubr.bf16.mxu0 0
    %197 = vmatmul.mubr.bf16.gmra.mrb[0].mxu0 %v136
    %v198 = vpop.f32.mrb[0].mxu0
    %v199 = vadd.f32 0.0, %v198
    %v200 = vpop.f32.mrb[0].mxu0
    %v201 = vpop.f32.mrb[0].mxu0
    %v202 = vadd.f32 0.0, %v201
    %v203 = vpop.f32.mrb[0].mxu0
    %204 = vmatprep.mubr.bf16.mxu0 0
    %205 = vmatmul.mubr.bf16.gmra.mrb[0].mxu0 %v139
    %v206 = vpop.f32.mrb[0].mxu0
    %v207 = vadd.f32 0.0, %v206
    %v208 = vpop.f32.mrb[0].mxu0
    %v209 = vpop.f32.mrb[0].mxu0
    %v210 = vadd.f32 0.0, %v209
    %v211 = vpop.f32.mrb[0].mxu0
    %212 = vmatprep.mubr.bf16.mxu0 0
    %213 = vmatmul.mubr.bf16.gmra.mrb[0].mxu0 %v142
    %v214 = vpop.f32.mrb[0].mxu0
    %v215 = vadd.f32 0.0, %v214
    %v216 = vpop.f32.mrb[0].mxu0
    %v217 = vpop.f32.mrb[0].mxu0
    %v218 = vadd.f32 0.0, %v217
    %v219 = vpop.f32.mrb[0].mxu0
    %220 = vmatprep.mubr.bf16.mxu0 0
    %221 = vmatmul.mubr.bf16.gmra.mrb[0].mxu0 %v145
    %v222 = vpop.f32.mrb[0].mxu0
    %v223 = vadd.f32 0.0, %v222
    %v224 = vpop.f32.mrb[0].mxu0
    %v225 = vpop.f32.mrb[0].mxu0
    %v226 = vadd.f32 0.0, %v225
    %v227 = vpop.f32.mrb[0].mxu0
    %228 = vmatprep.mubr.bf16.mxu0 0
    %229 = vmatmul.mubr.bf16.gmra.mrb[0].mxu0 %v148
    %v230 = vpop.f32.mrb[0].mxu0
    %v231 = vadd.f32 0.0, %v230
    %v232 = vpop.f32.mrb[0].mxu0
    %v233 = vpop.f32.mrb[0].mxu0
    %v234 = vadd.f32 0.0, %v233
    %v235 = vpop.f32.mrb[0].mxu0
    %236 = vmatprep.mubr.bf16.mxu0 0
    %237 = vmatmul.mubr.bf16.gmra.mrb[0].mxu0 %v151
    %v238 = vpop.f32.mrb[0].mxu0
    %v239 = vadd.f32 0.0, %v238
    %v240 = vpop.f32.mrb[0].mxu0
    %v241 = vpop.f32.mrb[0].mxu0
    %v242 = vadd.f32 0.0, %v241
    %v243 = vpop.f32.mrb[0].mxu0
    %244 = vmatprep.mubr.bf16.mxu0 0
    %245 = vmatmul.mubr.bf16.gmra.mrb[0].mxu0 %v154
    %v246 = vpop.f32.mrb[0].mxu0
    %v247 = vadd.f32 0.0, %v246
    %v248 = vpop.f32.mrb[0].mxu0
    %v249 = vpop.f32.mrb[0].mxu0
    %v250 = vadd.f32 0.0, %v249
    %v251 = vpop.f32.mrb[0].mxu0
    %252 = vdwg.mxu0
    %v253 = vsub.f32 %v191, 2.0
    %v254 = vsub.f32 %v194, 2.0
    %v255 = vsub.f32 %v199, 2.0
    %v256 = vsub.f32 %v202, 2.0
    %v257 = vsub.f32 %v207, 2.0
    %v258 = vsub.f32 %v210, 2.0
    %v259 = vsub.f32 %v215, 2.0
    %v260 = vsub.f32 %v218, 2.0
    %v261 = vsub.f32 %v223, 2.0
    %v262 = vsub.f32 %v226, 2.0
    %v263 = vsub.f32 %v231, 2.0
    %v264 = vsub.f32 %v234, 2.0
    %v265 = vsub.f32 %v239, 2.0
    %v266 = vsub.f32 %v242, 2.0
    %v267 = vsub.f32 %v247, 2.0
    %v268 = vsub.f32 %v250, 2.0
    %v269 = vmul.f32 %v253, 1.442695
    %v270 = vpow.pop %v269
    %v271 = vmul.f32 %v254, 1.442695
    %v272 = vpow.pop %v271
    %v273 = vmul.f32 %v255, 1.442695
    %v274 = vpow.pop %v273
    %v275 = vmul.f32 %v256, 1.442695
    %v276 = vpow.pop %v275
    %v277 = vmul.f32 %v257, 1.442695
    %v278 = vpow.pop %v277
    %v279 = vmul.f32 %v258, 1.442695
    %v280 = vpow.pop %v279
    %v281 = vmul.f32 %v259, 1.442695
    %v282 = vpow.pop %v281
    %v283 = vmul.f32 %v260, 1.442695
    %v284 = vpow.pop %v283
    %v285 = vmul.f32 %v261, 1.442695
    %v286 = vpow.pop %v285
    %v287 = vmul.f32 %v262, 1.442695
    %v288 = vpow.pop %v287
    %v289 = vmul.f32 %v263, 1.442695
    %v290 = vpow.pop %v289
    %v291 = vmul.f32 %v264, 1.442695
    %v292 = vpow.pop %v291
    %v293 = vmul.f32 %v265, 1.442695
    %v294 = vpow.pop %v293
    %v295 = vmul.f32 %v266, 1.442695
    %v296 = vpow.pop %v295
    %v297 = vmul.f32 %v267, 1.442695
    %v298 = vpow.pop %v297
    %v299 = vmul.f32 %v268, 1.442695
    %v300 = vpow.pop %v299
    %v301 = vld [vmem:[%s1] sm:$0xff]
    %v302 = vld [vmem:[%s1 + $0x8] sm:$0xff]
    %v303 = vld [vmem:[%s1 + $0x10] sm:$0xff]
    %v304 = vld [vmem:[%s1 + $0x18] sm:$0xff]
    %v305 = vld [vmem:[%s1 + $0x20] sm:$0xff]
    %v306 = vld [vmem:[%s1 + $0x28] sm:$0xff]
    %v307 = vld [vmem:[%s1 + $0x30] sm:$0xff]
    %v308 = vld [vmem:[%s1 + $0x38] sm:$0xff]
    %v309 = vld [vmem:[%s1 + $0x40] sm:$0xff]
    %v310 = vld [vmem:[%s1 + $0x48] sm:$0xff]
    %v311 = vld [vmem:[%s1 + $0x50] sm:$0xff]
    %v312 = vld [vmem:[%s1 + $0x58] sm:$0xff]
    %v313 = vld [vmem:[%s1 + $0x60] sm:$0xff]
    %v314 = vld [vmem:[%s1 + $0x68] sm:$0xff]
    %v315 = vld [vmem:[%s1 + $0x70] sm:$0xff]
    %v316 = vld [vmem:[%s1 + $0x78] sm:$0xff]
    %v317 = vld [vmem:[%s3] sm:$0x1]
    %s318 = smul.u32 0, 128
    %v319 = vlaneseq
    %v320 = vshrl.u32 %v319, 7
    %v321 = vadd.s32 %v320, 8
    %v322 = vadd.s32 %v320, 16
    %v323 = vadd.s32 %v320, 24
    %v324 = vadd.s32 %v320, 32
    %v325 = vadd.s32 %v320, 40
    %v326 = vadd.s32 %v320, 48
    %v327 = vadd.s32 %v320, 56
    %v328 = vadd.s32 %v320, 64
    %v329 = vadd.s32 %v320, 72
    %v330 = vadd.s32 %v320, 80
    %v331 = vadd.s32 %v320, 88
    %v332 = vadd.s32 %v320, 96
    %v333 = vadd.s32 %v320, 104
    %v334 = vadd.s32 %v320, 112
    %v335 = vadd.s32 %v320, 120
    %v336 = vstv %s318
    %v337 = vadd.s32 %v336, %v320
    %v338 = vadd.s32 %v336, %v321
    %v339 = vadd.s32 %v336, %v322
    %v340 = vadd.s32 %v336, %v323
    %v341 = vadd.s32 %v336, %v324
    %v342 = vadd.s32 %v336, %v325
    %v343 = vadd.s32 %v336, %v326
    %v344 = vadd.s32 %v336, %v327
    %v345 = vadd.s32 %v336, %v328
    %v346 = vadd.s32 %v336, %v329
    %v347 = vadd.s32 %v336, %v330
    %v348 = vadd.s32 %v336, %v331
    %v349 = vadd.s32 %v336, %v332
    %v350 = vadd.s32 %v336, %v333
    %v351 = vadd.s32 %v336, %v334
    %v352 = vadd.s32 %v336, %v335
    %s353 = smul.u32 0, 128
    %v354 = vlaneseq
    %v355 = vand.u32 %v354, 127
    %v356 = vstv %s353
    %v357 = vadd.s32 %v356, %v355
    %358 = vset.pattern.permute.xlu0 0
    %359 = vperm.xlu0 %358, %v301
    %v360 = vpop.permute.xlu0 %359
    %361 = vset.pattern.permute.xlu0 0
    %362 = vperm.xlu0 %361, %v302
    %v363 = vpop.permute.xlu0 %362
    %364 = vset.pattern.permute.xlu0 0
    %365 = vperm.xlu0 %364, %v303
    %v366 = vpop.permute.xlu0 %365
    %367 = vset.pattern.permute.xlu0 0
    %368 = vperm.xlu0 %367, %v304
    %v369 = vpop.permute.xlu0 %368
    %370 = vset.pattern.permute.xlu0 0
    %371 = vperm.xlu0 %370, %v305
    %v372 = vpop.permute.xlu0 %371
    %373 = vset.pattern.permute.xlu0 0
    %374 = vperm.xlu0 %373, %v306
    %v375 = vpop.permute.xlu0 %374
    %376 = vset.pattern.permute.xlu0 0
    %377 = vperm.xlu0 %376, %v307
    %v378 = vpop.permute.xlu0 %377
    %379 = vset.pattern.permute.xlu0 0
    %380 = vperm.xlu0 %379, %v308
    %v381 = vpop.permute.xlu0 %380
    %382 = vset.pattern.permute.xlu0 0
    %383 = vperm.xlu0 %382, %v309
    %v384 = vpop.permute.xlu0 %383
    %385 = vset.pattern.permute.xlu0 0
    %386 = vperm.xlu0 %385, %v310
    %v387 = vpop.permute.xlu0 %386
    %388 = vset.pattern.permute.xlu0 0
    %389 = vperm.xlu0 %388, %v311
    %v390 = vpop.permute.xlu0 %389
    %391 = vset.pattern.permute.xlu0 0
    %392 = vperm.xlu0 %391, %v312
    %v393 = vpop.permute.xlu0 %392
    %394 = vset.pattern.permute.xlu0 0
    %395 = vperm.xlu0 %394, %v313
    %v396 = vpop.permute.xlu0 %395
    %397 = vset.pattern.permute.xlu0 0
    %398 = vperm.xlu0 %397, %v314
    %v399 = vpop.permute.xlu0 %398
    %400 = vset.pattern.permute.xlu0 0
    %401 = vperm.xlu0 %400, %v315
    %v402 = vpop.permute.xlu0 %401
    %403 = vset.pattern.permute.xlu0 0
    %404 = vperm.xlu0 %403, %v316
    %v405 = vpop.permute.xlu0 %404
    %v406 = vlaneseq
    %v407 = vshrl.u32 %v406, 7
    %v408 = vsub.s32 0, %v407
    %v409 = vrot.slane %v317, %v408
    %vm410 = vcmp.eq.s32.totalorder %v360, %v409
    %vm411 = vcmp.eq.s32.totalorder %v363, %v409
    %vm412 = vcmp.eq.s32.totalorder %v366, %v409
    %vm413 = vcmp.eq.s32.totalorder %v369, %v409
    %vm414 = vcmp.eq.s32.totalorder %v372, %v409
    %vm415 = vcmp.eq.s32.totalorder %v375, %v409
    %vm416 = vcmp.eq.s32.totalorder %v378, %v409
    %vm417 = vcmp.eq.s32.totalorder %v381, %v409
    %vm418 = vcmp.eq.s32.totalorder %v384, %v409
    %vm419 = vcmp.eq.s32.totalorder %v387, %v409
    %vm420 = vcmp.eq.s32.totalorder %v390, %v409
    %vm421 = vcmp.eq.s32.totalorder %v393, %v409
    %vm422 = vcmp.eq.s32.totalorder %v396, %v409
    %vm423 = vcmp.eq.s32.totalorder %v399, %v409
    %vm424 = vcmp.eq.s32.totalorder %v402, %v409
    %vm425 = vcmp.eq.s32.totalorder %v405, %v409
    %vm426 = vcmp.ne.s32.totalorder %v301, 4294967295
    %vm427 = vcmp.ne.s32.totalorder %v302, 4294967295
    %vm428 = vcmp.ne.s32.totalorder %v303, 4294967295
    %vm429 = vcmp.ne.s32.totalorder %v304, 4294967295
    %vm430 = vcmp.ne.s32.totalorder %v305, 4294967295
    %vm431 = vcmp.ne.s32.totalorder %v306, 4294967295
    %vm432 = vcmp.ne.s32.totalorder %v307, 4294967295
    %vm433 = vcmp.ne.s32.totalorder %v308, 4294967295
    %vm434 = vcmp.ne.s32.totalorder %v309, 4294967295
    %vm435 = vcmp.ne.s32.totalorder %v310, 4294967295
    %vm436 = vcmp.ne.s32.totalorder %v311, 4294967295
    %vm437 = vcmp.ne.s32.totalorder %v312, 4294967295
    %vm438 = vcmp.ne.s32.totalorder %v313, 4294967295
    %vm439 = vcmp.ne.s32.totalorder %v314, 4294967295
    %vm440 = vcmp.ne.s32.totalorder %v315, 4294967295
    %vm441 = vcmp.ne.s32.totalorder %v316, 4294967295
    %v442 = vsel %vm426, 1, 0
    %v443 = vsel %vm427, 1, 0
    %v444 = vsel %vm428, 1, 0
    %v445 = vsel %vm429, 1, 0
    %v446 = vsel %vm430, 1, 0
    %v447 = vsel %vm431, 1, 0
    %v448 = vsel %vm432, 1, 0
    %v449 = vsel %vm433, 1, 0
    %v450 = vsel %vm434, 1, 0
    %v451 = vsel %vm435, 1, 0
    %v452 = vsel %vm436, 1, 0
    %v453 = vsel %vm437, 1, 0
    %v454 = vsel %vm438, 1, 0
    %v455 = vsel %vm439, 1, 0
    %v456 = vsel %vm440, 1, 0
    %v457 = vsel %vm441, 1, 0
    %458 = vset.pattern.permute.xlu0 0
    %459 = vperm.xlu0 %458, %v442
    %v460 = vpop.permute.xlu0 %459
    %461 = vset.pattern.permute.xlu0 0
    %462 = vperm.xlu0 %461, %v443
    %v463 = vpop.permute.xlu0 %462
    %464 = vset.pattern.permute.xlu0 0
    %465 = vperm.xlu0 %464, %v444
    %v466 = vpop.permute.xlu0 %465
    %467 = vset.pattern.permute.xlu0 0
    %468 = vperm.xlu0 %467, %v445
    %v469 = vpop.permute.xlu0 %468
    %470 = vset.pattern.permute.xlu0 0
    %471 = vperm.xlu0 %470, %v446
    %v472 = vpop.permute.xlu0 %471
    %473 = vset.pattern.permute.xlu0 0
    %474 = vperm.xlu0 %473, %v447
    %v475 = vpop.permute.xlu0 %474
    %476 = vset.pattern.permute.xlu0 0
    %477 = vperm.xlu0 %476, %v448
    %v478 = vpop.permute.xlu0 %477
    %479 = vset.pattern.permute.xlu0 0
    %480 = vperm.xlu0 %479, %v449
    %v481 = vpop.permute.xlu0 %480
    %482 = vset.pattern.permute.xlu0 0
    %483 = vperm.xlu0 %482, %v450
    %v484 = vpop.permute.xlu0 %483
    %485 = vset.pattern.permute.xlu0 0
    %486 = vperm.xlu0 %485, %v451
    %v487 = vpop.permute.xlu0 %486
    %488 = vset.pattern.permute.xlu0 0
    %489 = vperm.xlu0 %488, %v452
    %v490 = vpop.permute.xlu0 %489
    %491 = vset.pattern.permute.xlu0 0
    %492 = vperm.xlu0 %491, %v453
    %v493 = vpop.permute.xlu0 %492
    %494 = vset.pattern.permute.xlu0 0
    %495 = vperm.xlu0 %494, %v454
    %v496 = vpop.permute.xlu0 %495
    %497 = vset.pattern.permute.xlu0 0
    %498 = vperm.xlu0 %497, %v455
    %v499 = vpop.permute.xlu0 %498
    %500 = vset.pattern.permute.xlu0 0
    %501 = vperm.xlu0 %500, %v456
    %v502 = vpop.permute.xlu0 %501
    %503 = vset.pattern.permute.xlu0 0
    %504 = vperm.xlu0 %503, %v457
    %v505 = vpop.permute.xlu0 %504
    %vm506 = vcmp.eq.s32.totalorder %v460, 1
    %vm507 = vcmp.eq.s32.totalorder %v463, 1
    %vm508 = vcmp.eq.s32.totalorder %v466, 1
    %vm509 = vcmp.eq.s32.totalorder %v469, 1
    %vm510 = vcmp.eq.s32.totalorder %v472, 1
    %vm511 = vcmp.eq.s32.totalorder %v475, 1
    %vm512 = vcmp.eq.s32.totalorder %v478, 1
    %vm513 = vcmp.eq.s32.totalorder %v481, 1
    %vm514 = vcmp.eq.s32.totalorder %v484, 1
    %vm515 = vcmp.eq.s32.totalorder %v487, 1
    %vm516 = vcmp.eq.s32.totalorder %v490, 1
    %vm517 = vcmp.eq.s32.totalorder %v493, 1
    %vm518 = vcmp.eq.s32.totalorder %v496, 1
    %vm519 = vcmp.eq.s32.totalorder %v499, 1
    %vm520 = vcmp.eq.s32.totalorder %v502, 1
    %vm521 = vcmp.eq.s32.totalorder %v505, 1
    %vm522 = vmand %vm410, %vm506
    %vm523 = vmand %vm411, %vm507
    %vm524 = vmand %vm412, %vm508
    %vm525 = vmand %vm413, %vm509
    %vm526 = vmand %vm414, %vm510
    %vm527 = vmand %vm415, %vm511
    %vm528 = vmand %vm416, %vm512
    %vm529 = vmand %vm417, %vm513
    %vm530 = vmand %vm418, %vm514
    %vm531 = vmand %vm419, %vm515
    %vm532 = vmand %vm420, %vm516
    %vm533 = vmand %vm421, %vm517
    %vm534 = vmand %vm422, %vm518
    %vm535 = vmand %vm423, %vm519
    %vm536 = vmand %vm424, %vm520
    %vm537 = vmand %vm425, %vm521
    %vm538 = vcmp.ne.s32.totalorder %v317, 4294967295
    %v539 = vsel %vm538, 1, 0
    %v540 = vlaneseq
    %v541 = vshrl.u32 %v540, 7
    %v542 = vsub.s32 0, %v541
    %v543 = vrot.slane %v539, %v542
    %vm544 = vcmp.eq.s32.totalorder %v543, 1
    %vm545 = vmand %vm522, %vm544
    %vm546 = vmand %vm523, %vm544
    %vm547 = vmand %vm524, %vm544
    %vm548 = vmand %vm525, %vm544
    %vm549 = vmand %vm526, %vm544
    %vm550 = vmand %vm527, %vm544
    %vm551 = vmand %vm528, %vm544
    %vm552 = vmand %vm529, %vm544
    %vm553 = vmand %vm530, %vm544
    %vm554 = vmand %vm531, %vm544
    %vm555 = vmand %vm532, %vm544
    %vm556 = vmand %vm533, %vm544
    %vm557 = vmand %vm534, %vm544
    %vm558 = vmand %vm535, %vm544
    %vm559 = vmand %vm536, %vm544
    %vm560 = vmand %vm537, %vm544
    %vm561 = vcmp.eq.s32.totalorder %v337, %v357
    %vm562 = vcmp.eq.s32.totalorder %v338, %v357
    %vm563 = vcmp.eq.s32.totalorder %v339, %v357
    %vm564 = vcmp.eq.s32.totalorder %v340, %v357
    %vm565 = vcmp.eq.s32.totalorder %v341, %v357
    %vm566 = vcmp.eq.s32.totalorder %v342, %v357
    %vm567 = vcmp.eq.s32.totalorder %v343, %v357
    %vm568 = vcmp.eq.s32.totalorder %v344, %v357
    %vm569 = vcmp.eq.s32.totalorder %v345, %v357
    %vm570 = vcmp.eq.s32.totalorder %v346, %v357
    %vm571 = vcmp.eq.s32.totalorder %v347, %v357
    %vm572 = vcmp.eq.s32.totalorder %v348, %v357
    %vm573 = vcmp.eq.s32.totalorder %v349, %v357
    %vm574 = vcmp.eq.s32.totalorder %v350, %v357
    %vm575 = vcmp.eq.s32.totalorder %v351, %v357
    %vm576 = vcmp.eq.s32.totalorder %v352, %v357
    %vm577 = vmor %vm545, %vm561
    %vm578 = vmor %vm546, %vm562
    %vm579 = vmor %vm547, %vm563
    %vm580 = vmor %vm548, %vm564
    %vm581 = vmor %vm549, %vm565
    %vm582 = vmor %vm550, %vm566
    %vm583 = vmor %vm551, %vm567
    %vm584 = vmor %vm552, %vm568
    %vm585 = vmor %vm553, %vm569
    %vm586 = vmor %vm554, %vm570
    %vm587 = vmor %vm555, %vm571
    %vm588 = vmor %vm556, %vm572
    %vm589 = vmor %vm557, %vm573
    %vm590 = vmor %vm558, %vm574
    %vm591 = vmor %vm559, %vm575
    %vm592 = vmor %vm560, %vm576
    %v593 = vld [vmem:[#allocation2] sm:$0xff]
    %v594 = vld [vmem:[#allocation2 + $0x8] sm:$0xff]
    %v595 = vld [vmem:[#allocation2 + $0x10] sm:$0xff]
    %v596 = vld [vmem:[#allocation2 + $0x18] sm:$0xff]
    %v597 = vld [vmem:[#allocation2 + $0x20] sm:$0xff]
    %v598 = vld [vmem:[#allocation2 + $0x28] sm:$0xff]
    %v599 = vld [vmem:[#allocation2 + $0x30] sm:$0xff]
    %v600 = vld [vmem:[#allocation2 + $0x38] sm:$0xff]
    %v601 = vld [vmem:[#allocation2 + $0x40] sm:$0xff]
    %v602 = vld [vmem:[#allocation2 + $0x48] sm:$0xff]
    %v603 = vld [vmem:[#allocation2 + $0x50] sm:$0xff]
    %v604 = vld [vmem:[#allocation2 + $0x58] sm:$0xff]
    %v605 = vld [vmem:[#allocation2 + $0x60] sm:$0xff]
    %v606 = vld [vmem:[#allocation2 + $0x68] sm:$0xff]
    %v607 = vld [vmem:[#allocation2 + $0x70] sm:$0xff]
    %v608 = vld [vmem:[#allocation2 + $0x78] sm:$0xff]
    %v609 = vsel %vm577, %v270, 0.0
    %v610 = vsel %vm578, %v272, 0.0
    %v611 = vsel %vm579, %v274, 0.0
    %v612 = vsel %vm580, %v276, 0.0
    %v613 = vsel %vm581, %v278, 0.0
    %v614 = vsel %vm582, %v280, 0.0
    %v615 = vsel %vm583, %v282, 0.0
    %v616 = vsel %vm584, %v284, 0.0
    %v617 = vsel %vm585, %v286, 0.0
    %v618 = vsel %vm586, %v288, 0.0
    %v619 = vsel %vm587, %v290, 0.0
    %v620 = vsel %vm588, %v292, 0.0
    %v621 = vsel %vm589, %v294, 0.0
    %v622 = vsel %vm590, %v296, 0.0
    %v623 = vsel %vm591, %v298, 0.0
    %v624 = vsel %vm592, %v300, 0.0
    %625 = vadd.xlane.f32.xlu0 %v609
    %v626 = vpop.xlane.xlu0 %625
    %627 = vadd.xlane.f32.xlu0 %v610
    %v628 = vpop.xlane.xlu0 %627
    %629 = vadd.xlane.f32.xlu0 %v611
    %v630 = vpop.xlane.xlu0 %629
    %631 = vadd.xlane.f32.xlu0 %v612
    %v632 = vpop.xlane.xlu0 %631
    %633 = vadd.xlane.f32.xlu0 %v613
    %v634 = vpop.xlane.xlu0 %633
    %635 = vadd.xlane.f32.xlu0 %v614
    %v636 = vpop.xlane.xlu0 %635
    %637 = vadd.xlane.f32.xlu0 %v615
    %v638 = vpop.xlane.xlu0 %637
    %639 = vadd.xlane.f32.xlu0 %v616
    %v640 = vpop.xlane.xlu0 %639
    %641 = vadd.xlane.f32.xlu0 %v617
    %v642 = vpop.xlane.xlu0 %641
    %643 = vadd.xlane.f32.xlu0 %v618
    %v644 = vpop.xlane.xlu0 %643
    %645 = vadd.xlane.f32.xlu0 %v619
    %v646 = vpop.xlane.xlu0 %645
    %647 = vadd.xlane.f32.xlu0 %v620
    %v648 = vpop.xlane.xlu0 %647
    %649 = vadd.xlane.f32.xlu0 %v621
    %v650 = vpop.xlane.xlu0 %649
    %651 = vadd.xlane.f32.xlu0 %v622
    %v652 = vpop.xlane.xlu0 %651
    %653 = vadd.xlane.f32.xlu0 %v623
    %v654 = vpop.xlane.xlu0 %653
    %655 = vadd.xlane.f32.xlu0 %v624
    %v656 = vpop.xlane.xlu0 %655
    %v657 = vadd.f32 %v593, %v626
    %v658 = vadd.f32 %v594, %v628
    %v659 = vadd.f32 %v595, %v630
    %v660 = vadd.f32 %v596, %v632
    %v661 = vadd.f32 %v597, %v634
    %v662 = vadd.f32 %v598, %v636
    %v663 = vadd.f32 %v599, %v638
    %v664 = vadd.f32 %v600, %v640
    %v665 = vadd.f32 %v601, %v642
    %v666 = vadd.f32 %v602, %v644
    %v667 = vadd.f32 %v603, %v646
    %v668 = vadd.f32 %v604, %v648
    %v669 = vadd.f32 %v605, %v650
    %v670 = vadd.f32 %v606, %v652
    %v671 = vadd.f32 %v607, %v654
    %v672 = vadd.f32 %v608, %v656
    %vm673 = vcmask 7168
    %674 = vst.msk [vmem:[#allocation2] sm:$0xff] %vm673, %v657
    %675 = vst.msk [vmem:[#allocation2 + $0x8] sm:$0xff] %vm673, %v658
    %676 = vst.msk [vmem:[#allocation2 + $0x10] sm:$0xff] %vm673, %v659
    %677 = vst.msk [vmem:[#allocation2 + $0x18] sm:$0xff] %vm673, %v660
    %678 = vst.msk [vmem:[#allocation2 + $0x20] sm:$0xff] %vm673, %v661
    %679 = vst.msk [vmem:[#allocation2 + $0x28] sm:$0xff] %vm673, %v662
    %680 = vst.msk [vmem:[#allocation2 + $0x30] sm:$0xff] %vm673, %v663
    %681 = vst.msk [vmem:[#allocation2 + $0x38] sm:$0xff] %vm673, %v664
    %682 = vst.msk [vmem:[#allocation2 + $0x40] sm:$0xff] %vm673, %v665
    %683 = vst.msk [vmem:[#allocation2 + $0x48] sm:$0xff] %vm673, %v666
    %684 = vst.msk [vmem:[#allocation2 + $0x50] sm:$0xff] %vm673, %v667
    %685 = vst.msk [vmem:[#allocation2 + $0x58] sm:$0xff] %vm673, %v668
    %686 = vst.msk [vmem:[#allocation2 + $0x60] sm:$0xff] %vm673, %v669
    %687 = vst.msk [vmem:[#allocation2 + $0x68] sm:$0xff] %vm673, %v670
    %688 = vst.msk [vmem:[#allocation2 + $0x70] sm:$0xff] %vm673, %v671
    %689 = vst.msk [vmem:[#allocation2 + $0x78] sm:$0xff] %vm673, %v672
    %v690 = vld [vmem:[#allocation3] sm:$0xff]
    %v691 = vld [vmem:[#allocation3 + $0x8] sm:$0xff]
    %v692 = vld [vmem:[#allocation3 + $0x10] sm:$0xff]
    %v693 = vld [vmem:[#allocation3 + $0x18] sm:$0xff]
    %v694 = vld [vmem:[#allocation3 + $0x20] sm:$0xff]
    %v695 = vld [vmem:[#allocation3 + $0x28] sm:$0xff]
    %v696 = vld [vmem:[#allocation3 + $0x30] sm:$0xff]
    %v697 = vld [vmem:[#allocation3 + $0x38] sm:$0xff]
    %v698 = vld [vmem:[#allocation3 + $0x40] sm:$0xff]
    %v699 = vld [vmem:[#allocation3 + $0x48] sm:$0xff]
    %v700 = vld [vmem:[#allocation3 + $0x50] sm:$0xff]
    %v701 = vld [vmem:[#allocation3 + $0x58] sm:$0xff]
    %v702 = vld [vmem:[#allocation3 + $0x60] sm:$0xff]
    %v703 = vld [vmem:[#allocation3 + $0x68] sm:$0xff]
    %v704 = vld [vmem:[#allocation3 + $0x70] sm:$0xff]
    %v705 = vld [vmem:[#allocation3 + $0x78] sm:$0xff]
    %706 = vadd.xlane.f32.xlu0 %v270
    %v707 = vpop.xlane.xlu0 %706
    %708 = vadd.xlane.f32.xlu0 %v272
    %v709 = vpop.xlane.xlu0 %708
    %710 = vadd.xlane.f32.xlu0 %v274
    %v711 = vpop.xlane.xlu0 %710
    %712 = vadd.xlane.f32.xlu0 %v276
    %v713 = vpop.xlane.xlu0 %712
    %714 = vadd.xlane.f32.xlu0 %v278
    %v715 = vpop.xlane.xlu0 %714
    %716 = vadd.xlane.f32.xlu0 %v280
    %v717 = vpop.xlane.xlu0 %716
    %718 = vadd.xlane.f32.xlu0 %v282
    %v719 = vpop.xlane.xlu0 %718
    %720 = vadd.xlane.f32.xlu0 %v284
    %v721 = vpop.xlane.xlu0 %720
    %722 = vadd.xlane.f32.xlu0 %v286
    %v723 = vpop.xlane.xlu0 %722
    %724 = vadd.xlane.f32.xlu0 %v288
    %v725 = vpop.xlane.xlu0 %724
    %726 = vadd.xlane.f32.xlu0 %v290
    %v727 = vpop.xlane.xlu0 %726
    %728 = vadd.xlane.f32.xlu0 %v292
    %v729 = vpop.xlane.xlu0 %728
    %730 = vadd.xlane.f32.xlu0 %v294
    %v731 = vpop.xlane.xlu0 %730
    %732 = vadd.xlane.f32.xlu0 %v296
    %v733 = vpop.xlane.xlu0 %732
    %734 = vadd.xlane.f32.xlu0 %v298
    %v735 = vpop.xlane.xlu0 %734
    %736 = vadd.xlane.f32.xlu0 %v300
    %v737 = vpop.xlane.xlu0 %736
    %v738 = vadd.f32 %v690, %v707
    %v739 = vadd.f32 %v691, %v709
    %v740 = vadd.f32 %v692, %v711
    %v741 = vadd.f32 %v693, %v713
    %v742 = vadd.f32 %v694, %v715
    %v743 = vadd.f32 %v695, %v717
    %v744 = vadd.f32 %v696, %v719
    %v745 = vadd.f32 %v697, %v721
    %v746 = vadd.f32 %v698, %v723
    %v747 = vadd.f32 %v699, %v725
    %v748 = vadd.f32 %v700, %v727
    %v749 = vadd.f32 %v701, %v729
    %v750 = vadd.f32 %v702, %v731
    %v751 = vadd.f32 %v703, %v733
    %v752 = vadd.f32 %v704, %v735
    %v753 = vadd.f32 %v705, %v737
    %754 = vst.msk [vmem:[#allocation3] sm:$0xff] %vm673, %v738
    %755 = vst.msk [vmem:[#allocation3 + $0x8] sm:$0xff] %vm673, %v739
    %756 = vst.msk [vmem:[#allocation3 + $0x10] sm:$0xff] %vm673, %v740
    %757 = vst.msk [vmem:[#allocation3 + $0x18] sm:$0xff] %vm673, %v741
    %758 = vst.msk [vmem:[#allocation3 + $0x20] sm:$0xff] %vm673, %v742
    %759 = vst.msk [vmem:[#allocation3 + $0x28] sm:$0xff] %vm673, %v743
    %760 = vst.msk [vmem:[#allocation3 + $0x30] sm:$0xff] %vm673, %v744
    %761 = vst.msk [vmem:[#allocation3 + $0x38] sm:$0xff] %vm673, %v745
    %762 = vst.msk [vmem:[#allocation3 + $0x40] sm:$0xff] %vm673, %v746
    %763 = vst.msk [vmem:[#allocation3 + $0x48] sm:$0xff] %vm673, %v747
    %764 = vst.msk [vmem:[#allocation3 + $0x50] sm:$0xff] %vm673, %v748
    %765 = vst.msk [vmem:[#allocation3 + $0x58] sm:$0xff] %vm673, %v749
    %766 = vst.msk [vmem:[#allocation3 + $0x60] sm:$0xff] %vm673, %v750
    %767 = vst.msk [vmem:[#allocation3 + $0x68] sm:$0xff] %vm673, %v751
    %768 = vst.msk [vmem:[#allocation3 + $0x70] sm:$0xff] %vm673, %v752
    %769 = vst.msk [vmem:[#allocation3 + $0x78] sm:$0xff] %vm673, %v753
    // Predicated region
    $region22: #{tpu_custom_call.1} parent=1 // pred_check
      %p770 = pneg %p22
    $region23: #{tpu_custom_call.1} parent=1 // pred_check_branch
      %772 = sbr.rel (%p770) target = $region25
    $region24: #{tpu_custom_call.1} parent=1 // pred_region
      %v773 = vld [vmem:[#allocation3] sm:$0xff]
      %v774 = vld [vmem:[#allocation3 + $0x8] sm:$0xff]
      %v775 = vld [vmem:[#allocation3 + $0x10] sm:$0xff]
      %v776 = vld [vmem:[#allocation3 + $0x18] sm:$0xff]
      %v777 = vld [vmem:[#allocation3 + $0x20] sm:$0xff]
      %v778 = vld [vmem:[#allocation3 + $0x28] sm:$0xff]
      %v779 = vld [vmem:[#allocation3 + $0x30] sm:$0xff]
      %v780 = vld [vmem:[#allocation3 + $0x38] sm:$0xff]
      %v781 = vld [vmem:[#allocation3 + $0x40] sm:$0xff]
      %v782 = vld [vmem:[#allocation3 + $0x48] sm:$0xff]
      %v783 = vld [vmem:[#allocation3 + $0x50] sm:$0xff]
      %v784 = vld [vmem:[#allocation3 + $0x58] sm:$0xff]
      %v785 = vld [vmem:[#allocation3 + $0x60] sm:$0xff]
      %v786 = vld [vmem:[#allocation3 + $0x68] sm:$0xff]
      %v787 = vld [vmem:[#allocation3 + $0x70] sm:$0xff]
      %v788 = vld [vmem:[#allocation3 + $0x78] sm:$0xff]
      %v789 = vadd.f32 %v773, -16.240234
      %v790 = vadd.f32 %v774, -16.240234
      %v791 = vadd.f32 %v775, -16.240234
      %v792 = vadd.f32 %v776, -16.240234
      %v793 = vadd.f32 %v777, -16.240234
      %v794 = vadd.f32 %v778, -16.240234
      %v795 = vadd.f32 %v779, -16.240234
      %v796 = vadd.f32 %v780, -16.240234
      %v797 = vadd.f32 %v781, -16.240234
      %v798 = vadd.f32 %v782, -16.240234
      %v799 = vadd.f32 %v783, -16.240234
      %v800 = vadd.f32 %v784, -16.240234
      %v801 = vadd.f32 %v785, -16.240234
      %v802 = vadd.f32 %v786, -16.240234
      %v803 = vadd.f32 %v787, -16.240234
      %v804 = vadd.f32 %v788, -16.240234
      %v805 = vld [vmem:[#allocation2] sm:$0xff]
      %v806 = vld [vmem:[#allocation2 + $0x8] sm:$0xff]
      %v807 = vld [vmem:[#allocation2 + $0x10] sm:$0xff]
      %v808 = vld [vmem:[#allocation2 + $0x18] sm:$0xff]
      %v809 = vld [vmem:[#allocation2 + $0x20] sm:$0xff]
      %v810 = vld [vmem:[#allocation2 + $0x28] sm:$0xff]
      %v811 = vld [vmem:[#allocation2 + $0x30] sm:$0xff]
      %v812 = vld [vmem:[#allocation2 + $0x38] sm:$0xff]
      %v813 = vld [vmem:[#allocation2 + $0x40] sm:$0xff]
      %v814 = vld [vmem:[#allocation2 + $0x48] sm:$0xff]
      %v815 = vld [vmem:[#allocation2 + $0x50] sm:$0xff]
      %v816 = vld [vmem:[#allocation2 + $0x58] sm:$0xff]
      %v817 = vld [vmem:[#allocation2 + $0x60] sm:$0xff]
      %v818 = vld [vmem:[#allocation2 + $0x68] sm:$0xff]
      %v819 = vld [vmem:[#allocation2 + $0x70] sm:$0xff]
      %v820 = vld [vmem:[#allocation2 + $0x78] sm:$0xff]
      %vm821 = vcmp.gt.f32.partialorder %v805, 0.0
      %vm822 = vcmp.gt.f32.partialorder %v806, 0.0
      %vm823 = vcmp.gt.f32.partialorder %v807, 0.0
      %vm824 = vcmp.gt.f32.partialorder %v808, 0.0
      %vm825 = vcmp.gt.f32.partialorder %v809, 0.0
      %vm826 = vcmp.gt.f32.partialorder %v810, 0.0
      %vm827 = vcmp.gt.f32.partialorder %v811, 0.0
      %vm828 = vcmp.gt.f32.partialorder %v812, 0.0
      %vm829 = vcmp.gt.f32.partialorder %v813, 0.0
      %vm830 = vcmp.gt.f32.partialorder %v814, 0.0
      %vm831 = vcmp.gt.f32.partialorder %v815, 0.0
      %vm832 = vcmp.gt.f32.partialorder %v816, 0.0
      %vm833 = vcmp.gt.f32.partialorder %v817, 0.0
      %vm834 = vcmp.gt.f32.partialorder %v818, 0.0
      %vm835 = vcmp.gt.f32.partialorder %v819, 0.0
      %vm836 = vcmp.gt.f32.partialorder %v820, 0.0
      %vm837 = vcmp.lt.s32.totalorder %v337, 8
      %vm838 = vcmp.lt.s32.totalorder %v338, 8
      %vm839 = vcmp.lt.s32.totalorder %v339, 8
      %vm840 = vcmp.lt.s32.totalorder %v340, 8
      %vm841 = vcmp.lt.s32.totalorder %v341, 8
      %vm842 = vcmp.lt.s32.totalorder %v342, 8
      %vm843 = vcmp.lt.s32.totalorder %v343, 8
      %vm844 = vcmp.lt.s32.totalorder %v344, 8
      %vm845 = vcmp.lt.s32.totalorder %v345, 8
      %vm846 = vcmp.lt.s32.totalorder %v346, 8
      %vm847 = vcmp.lt.s32.totalorder %v347, 8
      %vm848 = vcmp.lt.s32.totalorder %v348, 8
      %vm849 = vcmp.lt.s32.totalorder %v349, 8
      %vm850 = vcmp.lt.s32.totalorder %v350, 8
      %vm851 = vcmp.lt.s32.totalorder %v351, 8
      %vm852 = vcmp.lt.s32.totalorder %v352, 8
      %vm853 = vmand %vm821, %vm837
      %vm854 = vmand %vm822, %vm838
      %vm855 = vmand %vm823, %vm839
      %vm856 = vmand %vm824, %vm840
      %vm857 = vmand %vm825, %vm841
      %vm858 = vmand %vm826, %vm842
      %vm859 = vmand %vm827, %vm843
      %vm860 = vmand %vm828, %vm844
      %vm861 = vmand %vm829, %vm845
      %vm862 = vmand %vm830, %vm846
      %vm863 = vmand %vm831, %vm847
      %vm864 = vmand %vm832, %vm848
      %vm865 = vmand %vm833, %vm849
      %vm866 = vmand %vm834, %vm850
      %vm867 = vmand %vm835, %vm851
      %vm868 = vmand %vm836, %vm852
      %v869 = vlog2.pop %v789
      %v870 = vmul.f32 %v869, 0.6931472
      %v871 = vlog2.pop %v790
      %v872 = vmul.f32 %v871, 0.6931472
      %v873 = vlog2.pop %v791
      %v874 = vmul.f32 %v873, 0.6931472
      %v875 = vlog2.pop %v792
      %v876 = vmul.f32 %v875, 0.6931472
      %v877 = vlog2.pop %v793
      %v878 = vmul.f32 %v877, 0.6931472
      %v879 = vlog2.pop %v794
      %v880 = vmul.f32 %v879, 0.6931472
      %v881 = vlog2.pop %v795
      %v882 = vmul.f32 %v881, 0.6931472
      %v883 = vlog2.pop %v796
      %v884 = vmul.f32 %v883, 0.6931472
      %v885 = vlog2.pop %v797
      %v886 = vmul.f32 %v885, 0.6931472
      %v887 = vlog2.pop %v798
      %v888 = vmul.f32 %v887, 0.6931472
      %v889 = vlog2.pop %v799
      %v890 = vmul.f32 %v889, 0.6931472
      %v891 = vlog2.pop %v800
      %v892 = vmul.f32 %v891, 0.6931472
      %v893 = vlog2.pop %v801
      %v894 = vmul.f32 %v893, 0.6931472
      %v895 = vlog2.pop %v802
      %v896 = vmul.f32 %v895, 0.6931472
      %v897 = vlog2.pop %v803
      %v898 = vmul.f32 %v897, 0.6931472
      %v899 = vlog2.pop %v804
      %v900 = vmul.f32 %v899, 0.6931472
      %v901 = vsel %vm853, %v805, 1.0
      %v902 = vsel %vm854, %v806, 1.0
      %v903 = vsel %vm855, %v807, 1.0
      %v904 = vsel %vm856, %v808, 1.0
      %v905 = vsel %vm857, %v809, 1.0
      %v906 = vsel %vm858, %v810, 1.0
      %v907 = vsel %vm859, %v811, 1.0
      %v908 = vsel %vm860, %v812, 1.0
      %v909 = vsel %vm861, %v813, 1.0
      %v910 = vsel %vm862, %v814, 1.0
      %v911 = vsel %vm863, %v815, 1.0
      %v912 = vsel %vm864, %v816, 1.0
      %v913 = vsel %vm865, %v817, 1.0
      %v914 = vsel %vm866, %v818, 1.0
      %v915 = vsel %vm867, %v819, 1.0
      %v916 = vsel %vm868, %v820, 1.0
      %v917 = vlog2.pop %v901
      %v918 = vmul.f32 %v917, 0.6931472
      %v919 = vlog2.pop %v902
      %v920 = vmul.f32 %v919, 0.6931472
      %v921 = vlog2.pop %v903
      %v922 = vmul.f32 %v921, 0.6931472
      %v923 = vlog2.pop %v904
      %v924 = vmul.f32 %v923, 0.6931472
      %v925 = vlog2.pop %v905
      %v926 = vmul.f32 %v925, 0.6931472
      %v927 = vlog2.pop %v906
      %v928 = vmul.f32 %v927, 0.6931472
      %v929 = vlog2.pop %v907
      %v930 = vmul.f32 %v929, 0.6931472
      %v931 = vlog2.pop %v908
      %v932 = vmul.f32 %v931, 0.6931472
      %v933 = vlog2.pop %v909
      %v934 = vmul.f32 %v933, 0.6931472
      %v935 = vlog2.pop %v910
      %v936 = vmul.f32 %v935, 0.6931472
      %v937 = vlog2.pop %v911
      %v938 = vmul.f32 %v937, 0.6931472
      %v939 = vlog2.pop %v912
      %v940 = vmul.f32 %v939, 0.6931472
      %v941 = vlog2.pop %v913
      %v942 = vmul.f32 %v941, 0.6931472
      %v943 = vlog2.pop %v914
      %v944 = vmul.f32 %v943, 0.6931472
      %v945 = vlog2.pop %v915
      %v946 = vmul.f32 %v945, 0.6931472
      %v947 = vlog2.pop %v916
      %v948 = vmul.f32 %v947, 0.6931472
      %v949 = vsub.f32 %v870, %v918
      %v950 = vsub.f32 %v872, %v920
      %v951 = vsub.f32 %v874, %v922
      %v952 = vsub.f32 %v876, %v924
      %v953 = vsub.f32 %v878, %v926
      %v954 = vsub.f32 %v880, %v928
      %v955 = vsub.f32 %v882, %v930
      %v956 = vsub.f32 %v884, %v932
      %v957 = vsub.f32 %v886, %v934
      %v958 = vsub.f32 %v888, %v936
      %v959 = vsub.f32 %v890, %v938
      %v960 = vsub.f32 %v892, %v940
      %v961 = vsub.f32 %v894, %v942
      %v962 = vsub.f32 %v896, %v944
      %v963 = vsub.f32 %v898, %v946
      %v964 = vsub.f32 %v900, %v948
      %v965 = vsel %vm853, %v949, 0.0
      %v966 = vsel %vm854, %v950, 0.0
      %v967 = vsel %vm855, %v951, 0.0
      %v968 = vsel %vm856, %v952, 0.0
      %v969 = vsel %vm857, %v953, 0.0
      %v970 = vsel %vm858, %v954, 0.0
      %v971 = vsel %vm859, %v955, 0.0
      %v972 = vsel %vm860, %v956, 0.0
      %v973 = vsel %vm861, %v957, 0.0
      %v974 = vsel %vm862, %v958, 0.0
      %v975 = vsel %vm863, %v959, 0.0
      %v976 = vsel %vm864, %v960, 0.0
      %v977 = vsel %vm865, %v961, 0.0
      %v978 = vsel %vm866, %v962, 0.0
      %v979 = vsel %vm867, %v963, 0.0
      %v980 = vsel %vm868, %v964, 0.0
      %v981 = vsel %vm673, %v965, 0.0
      %v982 = vsel %vm673, %v966, 0.0
      %v983 = vadd.f32 %v981, %v982
      %v984 = vsel %vm673, %v967, 0.0
      %v985 = vadd.f32 %v983, %v984
      %v986 = vsel %vm673, %v968, 0.0
      %v987 = vadd.f32 %v985, %v986
      %v988 = vsel %vm673, %v969, 0.0
      %v989 = vadd.f32 %v987, %v988
      %v990 = vsel %vm673, %v970, 0.0
      %v991 = vadd.f32 %v989, %v990
      %v992 = vsel %vm673, %v971, 0.0
      %v993 = vadd.f32 %v991, %v992
      %v994 = vsel %vm673, %v972, 0.0
      %v995 = vadd.f32 %v993, %v994
      %v996 = vsel %vm673, %v973, 0.0
      %v997 = vadd.f32 %v995, %v996
      %v998 = vsel %vm673, %v974, 0.0
      %v999 = vadd.f32 %v997, %v998
      %v1000 = vsel %vm673, %v975, 0.0
      %v1001 = vadd.f32 %v999, %v1000
      %v1002 = vsel %vm673, %v976, 0.0
      %v1003 = vadd.f32 %v1001, %v1002
      %v1004 = vsel %vm673, %v977, 0.0
      %v1005 = vadd.f32 %v1003, %v1004
      %v1006 = vsel %vm673, %v978, 0.0
      %v1007 = vadd.f32 %v1005, %v1006
      %v1008 = vsel %vm673, %v979, 0.0
      %v1009 = vadd.f32 %v1007, %v1008
      %v1010 = vsel %vm673, %v980, 0.0
      %v1011 = vadd.f32 %v1009, %v1010
      %1012 = vadd.xlane.f32.xlu0 %v1011
      %v1013 = vpop.xlane.xlu0 %1012
      %v1014 = vrot.slane %v1013, 4
      %v1015 = vadd.f32 %v1013, %v1014
      %v1016 = vrot.slane %v1015, 2
      %v1017 = vadd.f32 %v1015, %v1016
      %v1018 = vrot.slane %v1017, 1
      %v1019 = vadd.f32 %v1017, %v1018
      %s1020 = vtos %v1019
      %v1021 = vsel %vm853, 1, 0
      %v1022 = vsel %vm854, 1, 0
      %v1023 = vsel %vm855, 1, 0
      %v1024 = vsel %vm856, 1, 0
      %v1025 = vsel %vm857, 1, 0
      %v1026 = vsel %vm858, 1, 0
      %v1027 = vsel %vm859, 1, 0
      %v1028 = vsel %vm860, 1, 0
      %v1029 = vsel %vm861, 1, 0
      %v1030 = vsel %vm862, 1, 0
      %v1031 = vsel %vm863, 1, 0
      %v1032 = vsel %vm864, 1, 0
      %v1033 = vsel %vm865, 1, 0
      %v1034 = vsel %vm866, 1, 0
      %v1035 = vsel %vm867, 1, 0
      %v1036 = vsel %vm868, 1, 0
      %v1037 = vcvt.s32.f32 %v1021
      %v1038 = vcvt.s32.f32 %v1022
      %v1039 = vcvt.s32.f32 %v1023
      %v1040 = vcvt.s32.f32 %v1024
      %v1041 = vcvt.s32.f32 %v1025
      %v1042 = vcvt.s32.f32 %v1026
      %v1043 = vcvt.s32.f32 %v1027
      %v1044 = vcvt.s32.f32 %v1028
      %v1045 = vcvt.s32.f32 %v1029
      %v1046 = vcvt.s32.f32 %v1030
      %v1047 = vcvt.s32.f32 %v1031
      %v1048 = vcvt.s32.f32 %v1032
      %v1049 = vcvt.s32.f32 %v1033
      %v1050 = vcvt.s32.f32 %v1034
      %v1051 = vcvt.s32.f32 %v1035
      %v1052 = vcvt.s32.f32 %v1036
      %v1053 = vsel %vm673, %v1037, 0.0
      %v1054 = vsel %vm673, %v1038, 0.0
      %v1055 = vadd.f32 %v1053, %v1054
      %v1056 = vsel %vm673, %v1039, 0.0
      %v1057 = vadd.f32 %v1055, %v1056
      %v1058 = vsel %vm673, %v1040, 0.0
      %v1059 = vadd.f32 %v1057, %v1058
      %v1060 = vsel %vm673, %v1041, 0.0
      %v1061 = vadd.f32 %v1059, %v1060
      %v1062 = vsel %vm673, %v1042, 0.0
      %v1063 = vadd.f32 %v1061, %v1062
      %v1064 = vsel %vm673, %v1043, 0.0
      %v1065 = vadd.f32 %v1063, %v1064
      %v1066 = vsel %vm673, %v1044, 0.0
      %v1067 = vadd.f32 %v1065, %v1066
      %v1068 = vsel %vm673, %v1045, 0.0
      %v1069 = vadd.f32 %v1067, %v1068
      %v1070 = vsel %vm673, %v1046, 0.0
      %v1071 = vadd.f32 %v1069, %v1070
      %v1072 = vsel %vm673, %v1047, 0.0
      %v1073 = vadd.f32 %v1071, %v1072
      %v1074 = vsel %vm673, %v1048, 0.0
      %v1075 = vadd.f32 %v1073, %v1074
      %v1076 = vsel %vm673, %v1049, 0.0
      %v1077 = vadd.f32 %v1075, %v1076
      %v1078 = vsel %vm673, %v1050, 0.0
      %v1079 = vadd.f32 %v1077, %v1078
      %v1080 = vsel %vm673, %v1051, 0.0
      %v1081 = vadd.f32 %v1079, %v1080
      %v1082 = vsel %vm673, %v1052, 0.0
      %v1083 = vadd.f32 %v1081, %v1082
      %1084 = vadd.xlane.f32.xlu0 %v1083
      %v1085 = vpop.xlane.xlu0 %1084
      %v1086 = vrot.slane %v1085, 4
      %v1087 = vadd.f32 %v1085, %v1086
      %v1088 = vrot.slane %v1087, 2
      %v1089 = vadd.f32 %v1087, %v1088
      %v1090 = vrot.slane %v1089, 1
      %v1091 = vadd.f32 %v1089, %v1090
      %s1092 = vtos %v1091
      %v1093 = vstv %s1020
      %1094 = vst [vmem:[#allocation4] sm:$0xff] %v1093
      %v1095 = vstv %s1092
      %1096 = vst [vmem:[#allocation6] sm:$0xff] %v1095
    $region25: #{tpu_custom_call.1} parent=1 // pred_fallthru
      _
    // Predicated region
    $region26: #{tpu_custom_call.1} parent=1 // pred_check
      _
    $region27: #{tpu_custom_call.1} parent=1 // pred_check_branch
      %1098 = sbr.rel (0) target = $region29
    $region28: #{tpu_custom_call.1} parent=1 // pred_region
      %s1100 = ssub.s32 128, 128
      %1101 = vsyncadd [#allocation5], %s1100
      %s1103 = sshll.u32 [#allocation4], 4
      %s1104 = int_to_ptr.vmem [resolvable:$true] %s1103
      %1106 = dma.vmem_to_hbm [thread:$0]  %s1104, 128, %s4, [#allocation5]
    $region29: #{tpu_custom_call.1} parent=1 // pred_fallthru
      _
    // Predicated region
    $region30: #{tpu_custom_call.1} parent=1 // pred_check
      _
    $region31: #{tpu_custom_call.1} parent=1 // pred_check_branch
      %1108 = sbr.rel (0) target = $region33
    $region32: #{tpu_custom_call.1} parent=1 // pred_region
      %s1110 = ssub.s32 128, 128
      %1111 = vsyncadd [#allocation7], %s1110
      %s1113 = sshll.u32 [#allocation6], 4
      %s1114 = int_to_ptr.vmem [resolvable:$true] %s1113
      %1116 = dma.vmem_to_hbm [thread:$0]  %s1114, 128, %s5, [#allocation7]
    $region33: #{tpu_custom_call.1} parent=1 // pred_fallthru
      _
    // Predicated region
    $region34: #{tpu_custom_call.1} parent=1 // pred_check
      _
    $region35: #{tpu_custom_call.1} parent=1 // pred_check_branch
      %1118 = sbr.rel (0) target = $region37
    $region36: #{tpu_custom_call.1} parent=1 // pred_region
      %1119 = dma.done [#allocation5], 128
    $region37: #{tpu_custom_call.1} parent=1 // pred_fallthru
      _
    // Predicated region
    $region38: #{tpu_custom_call.1} parent=1 // pred_check
      _
    $region39: #{tpu_custom_call.1} parent=1 // pred_check_branch
      %1121 = sbr.rel (0) target = $region41
    $region40: #{tpu_custom_call.1} parent=1 // pred_region
      %1122 = dma.done [#allocation7], 128
    $region41: #{tpu_custom_call.1} parent=1 // pred_fallthru
      _
    %1123 = vsyncpa [#allocation5], 1
    %1124 = vsyncpa [#allocation7], 1

</llo_original>
